<compile_context>
chip_gen: v7x
topology: tpu7x:2x2x1
jax: 0.10.0
libtpu: 0.0.40
codegen_flags: <defaults>
</compile_context>

<pallas_src>
import functools

import jax
import jax.numpy as jnp
import numpy as np
from jax import lax
from jax.experimental import pallas as pl
from jax.experimental.pallas import tpu as pltpu

NUM_BITS = 8

# Path-A (VMEM-resident table + one-hot MXU gather) costs 2*N*V*D MXU flops, so
# above a few-K vocab a true row gather wins even if the table fits VMEM.
_PATH_A_MAX_VOCAB = 4096
_VOCAB_CHUNK = 512            # one-hot is tiled over the vocab in chunks of this


def _round_up(x, m):
    return ((x + m - 1) // m) * m


def _tpu_vmem_capacity_bytes():
    """Generation-aware VMEM capacity (v5e/v6e 128 MiB, v7x 64 MiB per TC)."""
    try:
        cap = int(pltpu.get_tpu_info().vmem_capacity_bytes)
        if cap > 0:
            return cap
    except Exception:
        pass
    return 64 * 1024 * 1024   # conservative fallback (v7x per-TensorCore)


# ---------------------------------------------------------------------------
# "__init__": symmetric per-tensor quantization (plain JAX glue, not a kernel)
# ---------------------------------------------------------------------------
def symmetric_quantize_weight(weight, num_bits):
    """distiller: symmetric_linear_quantization_params + linear_quantize_clamp."""
    n = (2.0 ** num_bits - 1.0) / 2.0
    sat_val = jnp.max(jnp.abs(weight))
    sat_val = jnp.where(sat_val == 0, n, sat_val)   # guard all-zero weight
    scale = (n / sat_val).astype(jnp.float32)       # stays on device, no host sync
    zero_point = jnp.zeros((), jnp.float32)
    qmin = -(2 ** (num_bits - 1))
    qmax = 2 ** (num_bits - 1) - 1
    w_q = jnp.clip(jnp.round(weight * scale - zero_point), qmin, qmax)
    return w_q.astype(jnp.float32), scale, zero_point


# ---------------------------------------------------------------------------
# Path A: table single-buffered in VMEM scratch; gather = vocab-chunked
#         one-hot MXU matmuls per token block
# ---------------------------------------------------------------------------
def _onehot_gather_dequant_kernel(idx_ref, w_hbm, qp_ref, out_ref,
                                  w_vmem, tbl_sem, *, vc):
    # idx_ref : VMEM int32 (TB, 1)    token ids of this block
    # w_hbm   : ANY/HBM bf16 (Vp, D)  quantized table (padded to a chunk multiple)
    # qp_ref  : SMEM f32 (2,)         [1/scale, zp/scale]
    # out_ref : VMEM f32 (TB, D)      output tile of this token block
    # w_vmem  : VMEM bf16 (Vp, D)     single-buffered resident copy of the table
    # tbl_sem : DMA sem (1,)
    @pl.when(pl.program_id(0) == 0)
    def _():
        cp = pltpu.make_async_copy(w_hbm, w_vmem, tbl_sem.at[0])
        cp.start()
        cp.wait()

    tb, d = out_ref.shape
    v_pad = w_vmem.shape[0]
    n_chunks = v_pad // vc

    idx = idx_ref[...]                                       # (TB, 1)
    iota = lax.broadcasted_iota(jnp.int32, (tb, vc), 1)      # hoisted once
    acc = jnp.zeros((tb, d), jnp.float32)
    # Static unroll over vocab chunks (<= _PATH_A_MAX_VOCAB / _VOCAB_CHUNK = 8):
    # intermediates are bounded to (TB, vc), never (TB, V).
    for c in range(n_chunks):
        onehot = (iota == (idx - c * vc)).astype(jnp.bfloat16)   # exact 0/1
        acc = acc + jnp.dot(onehot, w_vmem[pl.ds(c * vc, vc), :],
                            preferred_element_type=jnp.float32)
    out_ref[...] = acc * qp_ref[0] + qp_ref[1]               # fused dequant


def _embedding_fwd_vmem_table(idx_col, w_q, qparams, tb, vc, v_pad, vmem_cap):
    n_pad = idx_col.shape[0]
    v, d = w_q.shape
    nb = n_pad // tb

    # int8-range integer values are exact in bf16; resident table = Vp*D*2 bytes.
    w_bf16 = w_q.astype(jnp.bfloat16)
    if v_pad != v:
        w_bf16 = jnp.pad(w_bf16, ((0, v_pad - v), (0, 0)))
    # TODO(synk): on v5e/v6e an int8 resident table + int8 MXU matmul halves VMEM
    # and uses the int8 MXU path; kept bf16 here since v7x has no integer MXU.

    table_bytes = v_pad * d * 2
    needed = (table_bytes                 # single-buffered table scratch
              + 2 * tb * d * 4            # double-buffered output tiles
              + 2 * tb * 4                # idx tiles
              + tb * vc * (2 + 4)         # one-hot chunk + iota
              + tb * d * 4)               # accumulator
    vmem_limit = int(min(int(0.9 * vmem_cap), max(32 << 20, 2 * needed)))

    grid_spec = pltpu.PrefetchScalarGridSpec(
        num_scalar_prefetch=0,
        grid=(nb,),
        in_specs=[
            pl.BlockSpec((tb, 1), lambda i: (i, 0)),                # token ids
            pl.BlockSpec(memory_space=pl.ANY),                      # table (HBM)
            pl.BlockSpec(memory_space=pltpu.MemorySpace.SMEM),      # qparams
        ],
        out_specs=pl.BlockSpec((tb, d), lambda i: (i, 0)),
        scratch_shapes=[
            pltpu.VMEM((v_pad, d), jnp.bfloat16),   # single-buffered table
            pltpu.SemaphoreType.DMA((1,)),
        ],
    )
    return pl.pallas_call(
        functools.partial(_onehot_gather_dequant_kernel, vc=vc),
        out_shape=jax.ShapeDtypeStruct((n_pad, d), jnp.float32),
        grid_spec=grid_spec,
        # The table is loaded once at step 0 into a persistent scratch, so the
        # token axis must stay sequential on one core.
        # TODO(synk): v7x 2-TensorCore split via pl.core_map with a per-core
        # table load instead of a single "arbitrary" axis.
        compiler_params=pltpu.CompilerParams(
            dimension_semantics=("arbitrary",),
            vmem_limit_bytes=vmem_limit),
    )(idx_col, w_bf16, qparams)


# ---------------------------------------------------------------------------
# Path B: table in HBM, double-buffered per-row DMA gather per token block
# ---------------------------------------------------------------------------
def _dma_gather_dequant_kernel(idx_ref, w_hbm, qp_ref, out_ref, buf, sem):
    # idx_ref : SMEM int32 (N_pad,)   scalar-prefetched token ids (drive row DMAs)
    # w_hbm   : HBM  f32   (V, D)     quantized table (memory_space=pl.ANY)
    # qp_ref  : SMEM f32   (2,)       [1/scale, zp/scale]
    # out_ref : VMEM f32   (TB, D)    output tile of this token block
    # buf     : VMEM f32   (2, TB, D) double-buffered gather landing zone
    # sem     : DMA sems   (2,)
    i = pl.program_id(0)
    nb = pl.num_programs(0)
    tb, d = out_ref.shape
    unroll = 8   # tb is always a multiple of 8

    def issue_block(block, slot):
        base = block * tb
        if not isinstance(base, int):
            base = pl.multiple_of(base, tb)

        def body(t8, carry):
            t0 = pl.multiple_of(t8 * unroll, unroll)
            for u in range(unroll):          # manual unroll: back-to-back issues
                t = t0 + u
                row = idx_ref[base + t]
                pltpu.make_async_copy(
                    w_hbm.at[pl.ds(row, 1), :],
                    buf.at[slot, pl.ds(t, 1), :],
                    sem.at[slot],
                ).start()
            return carry

        lax.fori_loop(0, tb // unroll, body, 0)

    @pl.when(i == 0)
    def _():
        issue_block(0, 0)

    slot = i % 2

    # Keep the DMA queue fed: issue block i+1 (other slot/semaphore) BEFORE
    # waiting on block i; all scalar idx reads happen ahead of the wait.
    @pl.when(i + 1 < nb)
    def _():
        issue_block(i + 1, 1 - slot)

    # Aggregated wait: one descriptor covering all TB rows of this slot; its
    # byte count equals the sum of the TB issued (1, D) row copies on sem[slot].
    pltpu.make_async_copy(
        w_hbm.at[pl.ds(0, tb), :],
        buf.at[slot],
        sem.at[slot],
    ).wait()

    out_ref[...] = buf[slot] * qp_ref[0] + qp_ref[1]


def _embedding_fwd_hbm_gather(idx_flat, w_f32, qparams, tb, vmem_cap):
    n_pad = idx_flat.shape[0]
    v, d = w_f32.shape
    nb = n_pad // tb

    needed = 2 * tb * d * 4 + 2 * tb * d * 4   # gather buffers + output tiles
    vmem_limit = int(min(int(0.9 * vmem_cap), max(32 << 20, 4 * needed)))

    grid_spec = pltpu.PrefetchScalarGridSpec(
        num_scalar_prefetch=1,          # token ids land in SMEM before the grid
        grid=(nb,),
        in_specs=[
            pl.BlockSpec(memory_space=pl.ANY),                   # table stays in HBM
            pl.BlockSpec(memory_space=pltpu.MemorySpace.SMEM),   # qparams
        ],
        out_specs=pl.BlockSpec((tb, d), lambda i, idx: (i, 0)),
        scratch_shapes=[
            pltpu.VMEM((2, tb, d), jnp.float32),
            pltpu.SemaphoreType.DMA((2,)),
        ],
    )
    return pl.pallas_call(
        _dma_gather_dequant_kernel,
        out_shape=jax.ShapeDtypeStruct((n_pad, d), jnp.float32),
        grid_spec=grid_spec,
        # Cross-step prefetch chains scratch/semaphore state across iterations,
        # so keep the grid sequential.
        # TODO(synk): v7x: split token blocks across the 2 TensorCores
        # (core_map / leading core axis with per-core buffers + semaphores).
        compiler_params=pltpu.CompilerParams(
            dimension_semantics=("arbitrary",),
            vmem_limit_bytes=vmem_limit),
    )(idx_flat, w_f32, qparams)


# ---------------------------------------------------------------------------
# forward wrapper (RangeLinearEmbeddingWrapper.forward)
# ---------------------------------------------------------------------------
def range_linear_embedding_forward(indices, w_q, w_scale, w_zero_point, *,
                                   num_bits=NUM_BITS, tb=None,
                                   force_hbm_gather=False):
    """out = (W_q[indices] + zp) / scale, computed as W_q[idx]*(1/scale) + zp/scale."""
    v, d = w_q.shape
    out_leading = indices.shape
    # Clamp indices (nn.Embedding would raise on OOB; avoids OOB row DMAs /
    # silent zero rows from the one-hot path).
    idx = jnp.clip(indices.reshape(-1).astype(jnp.int32), 0, v - 1)
    n = idx.shape[0]

    vmem_cap = _tpu_vmem_capacity_bytes()

    # Path-A sizing: one-hot is chunked over the vocab; table is padded to the
    # chunk size and kept single-buffered in a VMEM scratch.
    vc = min(_VOCAB_CHUNK, _round_up(v, 128))
    v_pad = _round_up(v, vc)
    table_bytes = v_pad * d * 2     # bf16, single copy

    use_vmem_table = (
        (not force_hbm_gather)
        and num_bits <= 9                      # quantized values exact in bf16
        and v <= _PATH_A_MAX_VOCAB             # MXU-roofline crossover vs gather
        and table_bytes <= vmem_cap // 4       # leave room for tiles/acc/one-hot
    )

    # Token block: big enough to amortize ~0.35us grid-step overhead, clamped
    # for tiny N so we don't run mostly-padding blocks.
    if tb is None:
        tb = 256 if use_vmem_table else 512
    tb = max(8, _round_up(int(tb), 8))
    tb = min(tb, _round_up(n, 8))

    n_pad = _round_up(n, tb)
    if n_pad != n:
        idx = jnp.pad(idx, (0, n_pad - n))     # pad with row 0; trimmed below

    inv_scale = (1.0 / w_scale).astype(jnp.float32)
    # (q + zp)/scale == q * inv_scale + zp * inv_scale
    qparams = jnp.stack([inv_scale, w_zero_point * inv_scale]).astype(jnp.float32)

    if use_vmem_table:
        out = _embedding_fwd_vmem_table(idx.reshape(n_pad, 1), w_q, qparams,
                                        tb, vc, v_pad, vmem_cap)
    else:
        # TODO(synk): pack table rows bf16-2-per-u32 to halve row-DMA bytes in
        # the HBM gather path; kept f32 here (sub-sublane bf16 row DMAs need
        # the u32 repack trick).
        out = _embedding_fwd_hbm_gather(idx, w_q.astype(jnp.float32),
                                        qparams, tb, vmem_cap)

    return out[:n].reshape(out_leading + (d,))


if __name__ == "__main__":
    key = jax.random.PRNGKey(0)
    kw, ki = jax.random.split(key)

    # small shapes consistent with nn.Embedding: vocab=32, embed_dim=128, batch=2, seq=8
    V, D = 32, 128
    B, S = 2, 8

    weight = jax.random.normal(kw, (V, D), dtype=jnp.float32)
    indices = jax.random.randint(ki, (B, S), 0, V, dtype=jnp.int32)

    # ----- __init__: quantize the embedding table (plain-JAX glue) -----
    w_q, w_scale, w_zero_point = symmetric_quantize_weight(weight, NUM_BITS)

    # pure-JAX reference of the forward pass (module semantics)
    ref = (w_q[indices.reshape(-1)] + w_zero_point) / w_scale
    ref = np.asarray(ref.reshape(B, S, D))

    # ----- forward, path A: VMEM-resident table + chunked one-hot MXU gather -----
    out_a = range_linear_embedding_forward(indices, w_q, w_scale, w_zero_point)
    jax.block_until_ready(out_a)
    np.testing.assert_allclose(np.asarray(out_a), ref, rtol=1e-5, atol=1e-6)

    # ----- forward, path B: HBM table + double-buffered row-DMA gather -----
    out_b = range_linear_embedding_forward(indices, w_q, w_scale, w_zero_point,
                                           force_hbm_gather=True)
    jax.block_until_ready(out_b)
    np.testing.assert_allclose(np.asarray(out_b), ref, rtol=1e-5, atol=1e-6)

    print("KERNEL_OK")
</pallas_src>

<mosaic_0001>
module attributes {stable_mosaic.version = 11 : i64} {
  func.func @_onehot_gather_dequant_kernel(%arg0: i32, %arg1: memref<16x1xi32, #tpu.memory_space<vmem>>, %arg2: memref<128x128xbf16, #tpu.memory_space<any>>, %arg3: memref<2xf32, #tpu.memory_space<smem>>, %arg4: memref<16x128xf32, #tpu.memory_space<vmem>>, %arg5: memref<128x128xbf16, #tpu.memory_space<vmem>>, %arg6: memref<1x!tpu.dma_semaphore, #tpu.memory_space<semaphore_mem>>) attributes {dimension_semantics = [#tpu.dimension_semantics<arbitrary>], iteration_bounds = array<i64: 1>, scalar_prefetch = 0 : i64, scratch_operands = 2 : i64, tpu.core_type = #tpu.core_type<tc>, window_params = [{transform_indices = @transform_0, window_bounds = array<i64: 16, 1>}, {}, {transform_indices = @transform_2, window_bounds = array<i64: 2>}, {transform_indices = @transform_3, window_bounds = array<i64: 16, 128>}]} {
    %c0_i32 = arith.constant 0 : i32
    %0 = arith.cmpi eq, %arg0, %c0_i32 : i32
    %1 = arith.extui %0 : i1 to i32
    %c0_i32_0 = arith.constant 0 : i32
    %2 = arith.cmpi ne, %1, %c0_i32_0 : i32
    scf.if %2 {
      %c0_i32_9 = arith.constant 0 : i32
      %23 = tpu.memref_slice %arg6[%c0_i32_9] : memref<1x!tpu.dma_semaphore, #tpu.memory_space<semaphore_mem>> -> memref<1x!tpu.dma_semaphore, #tpu.memory_space<semaphore_mem>>
      %24 = tpu.memref_squeeze %23 : memref<1x!tpu.dma_semaphore, #tpu.memory_space<semaphore_mem>> -> memref<!tpu.dma_semaphore, #tpu.memory_space<semaphore_mem>>
      tpu.enqueue_dma source(%arg2 : memref<128x128xbf16, #tpu.memory_space<any>>) target(%arg5 : memref<128x128xbf16, #tpu.memory_space<vmem>>) target_semaphore(%24 : memref<!tpu.dma_semaphore, #tpu.memory_space<semaphore_mem>>)
      %c0_i32_10 = arith.constant 0 : i32
      %25 = tpu.memref_slice %arg6[%c0_i32_10] : memref<1x!tpu.dma_semaphore, #tpu.memory_space<semaphore_mem>> -> memref<1x!tpu.dma_semaphore, #tpu.memory_space<semaphore_mem>>
      %26 = tpu.memref_squeeze %25 : memref<1x!tpu.dma_semaphore, #tpu.memory_space<semaphore_mem>> -> memref<!tpu.dma_semaphore, #tpu.memory_space<semaphore_mem>>
      tpu.wait_dma2 semaphore(%26 : memref<!tpu.dma_semaphore, #tpu.memory_space<semaphore_mem>>) src(%arg2 : memref<128x128xbf16, #tpu.memory_space<any>>) dst(%arg5 : memref<128x128xbf16, #tpu.memory_space<vmem>>)
    } else {
    }
    %c0 = arith.constant 0 : index
    %c0_1 = arith.constant 0 : index
    %3 = vector.load %arg1[%c0, %c0_1] : memref<16x1xi32, #tpu.memory_space<vmem>>, vector<16x1xi32>
    %4 = tpu.iota {dimensions = array<i32: 1>} : vector<16x128xi32>
    %cst = arith.constant 0.000000e+00 : f32
    %5 = vector.broadcast %cst : f32 to vector<16x128xf32>
    %c0_i32_2 = arith.constant 0 : i32
    %6 = vector.broadcast %c0_i32_2 : i32 to vector<16x1xi32>
    %7 = arith.subi %3, %6 : vector<16x1xi32>
    %8 = vector.broadcast %7 : vector<16x1xi32> to vector<16x128xi32>
    %9 = arith.cmpi eq, %4, %8 : vector<16x128xi32>
    %10 = arith.extui %9 : vector<16x128xi1> to vector<16x128xi32>
    %11 = arith.sitofp %10 : vector<16x128xi32> to vector<16x128xf32>
    %12 = arith.truncf %11 : vector<16x128xf32> to vector<16x128xbf16>
    %c0_3 = arith.constant 0 : index
    %c0_4 = arith.constant 0 : index
    %13 = vector.load %arg5[%c0_3, %c0_4] : memref<128x128xbf16, #tpu.memory_space<vmem>>, vector<128x128xbf16>
    %cst_5 = arith.constant dense<0.000000e+00> : vector<16x128xf32>
    %14 = tpu.matmul %12, %13, %cst_5 {dimension_numbers = #tpu.dot_dimension_numbers<[1], [0], [0], [1], [0, 0, 1, 1], [], []>} : vector<16x128xbf16>, vector<128x128xbf16>, vector<16x128xf32> -> vector<16x128xf32>
    %15 = arith.addf %5, %14 : vector<16x128xf32>
    %c0_6 = arith.constant 0 : index
    %16 = memref.load %arg3[%c0_6] : memref<2xf32, #tpu.memory_space<smem>>
    %17 = vector.broadcast %16 : f32 to vector<16x128xf32>
    %18 = arith.mulf %15, %17 : vector<16x128xf32>
    %c1 = arith.constant 1 : index
    %19 = memref.load %arg3[%c1] : memref<2xf32, #tpu.memory_space<smem>>
    %20 = vector.broadcast %19 : f32 to vector<16x128xf32>
    %21 = arith.addf %18, %20 : vector<16x128xf32>
    %c0_7 = arith.constant 0 : index
    %c0_8 = arith.constant 0 : index
    %22 = vector.load %arg4[%c0_7, %c0_8] : memref<16x128xf32, #tpu.memory_space<vmem>>, vector<16x128xf32>
    tpu.vector_store %arg4[%c0_7, %c0_8], %21 {strides = array<i32>} : memref<16x128xf32, #tpu.memory_space<vmem>>, vector<16x128xf32>,
    return
  }
  func.func @transform_0(%arg0: i32) -> (i32, i32) {
    %c0_i32 = arith.constant 0 : i32
    %c0_i32_0 = arith.constant 0 : i32
    return %arg0, %c0_i32 : i32, i32
  }
  func.func @transform_2(%arg0: i32) -> i32 {
    %c0_i32 = arith.constant 0 : i32
    %c0_i32_0 = arith.constant 0 : i32
    return %c0_i32 : i32
  }
  func.func @transform_3(%arg0: i32) -> (i32, i32) {
    %c0_i32 = arith.constant 0 : i32
    %c0_i32_0 = arith.constant 0 : i32
    return %arg0, %c0_i32 : i32, i32
  }
}

</mosaic_0001>

<llo_original>
// kernel: tpu_custom_call.1
$region0: #{tpu_custom_call.1}
  #allocation0 [shape = 'u32[]', space=smem, size = 0x4, offset = 0x4, fixed_abs, tag = 'smem constant byte address 0x4 - core index']
  #allocation1 [shape = 'u32[144,128]{1,0:T(1,128)}', space=vmem, size = 0x12000, scoped, tag = 'internal scratch']
  #allocation2 [shape = 'bf16[128,128]{1,0:T(16,128)(2,1)}', space=vmem, size = 0x8000, scoped, tag = 'scratch operand']
  #allocation3 [shape = 's32[1]{0}', space=sflag, size = 0x4, scoped, tag = 'scratch operand']
  #allocation8 [shape = 's32[]', space=sflag, size = 0x4, offset = 0, fixed_abs, tag = 'sflag constant byte address 0x0 - dummy sync flag']
  #allocation9 [shape = 's32[]', space=sflag, size = 0x4, offset = 0, fixed_abs, tag = 'sflag constant byte address 0x0 - dummy sync flag']
  #allocation10 [shape = 'u32[]', space=smem, size = 0x4, offset = 0x44, fixed_abs, tag = 'smem constant byte address 0x44 - assertion arg 0']
  #allocation11 [shape = 'u32[]', space=smem, size = 0x4, offset = 0x48, fixed_abs, tag = 'smem constant byte address 0x48 - assertion arg 1']
  %s0 = inlined_call_operand.vmem [shape: s32[16,1], index: 0, kind: input, shape index: {}]
  %s1 = inlined_call_operand.hbm [shape: bf16[128,128], index: 1, kind: input, shape index: {}]
  %s2 = inlined_call_operand.vmem [shape: f32[2], index: 2, kind: input, shape index: {}]
  %s3 = inlined_call_operand.hbm [shape: f32[16,128], index: 3, kind: output, shape index: {}]
  %s4 = sld [smem:[#allocation0]]
  $region30: #{tpu_custom_call.1} parent=0
    _
  %s6 = ssub.s32 1, %s4
  %s7 = scalar_select 0, %s6, %s4
  $region1: #{tpu_custom_call.1} parent=0
    #allocation4 [shape = 'u8[512]{0}', space=smem, size = 0x200, scoped, tag = 'input window, operand 2, single buffered']
    #allocation5 [shape = 's32[1]{0}', space=sflag, size = 0x4, scoped, tag = 'scoped memory for tpu_custom_call.1']
    #allocation6 [shape = 's32[1]{0}', space=sflag, size = 0x4, scoped, tag = 'scoped memory for tpu_custom_call.1']
    #allocation7 [shape = 'u8[8192]{0}', space=vmem, size = 0x2000, scoped, tag = 'output window, operand 0, single buffered']
    %8 = vsyncpa [#allocation6], 0
    %9 = vsyncpa [#allocation5], 0
    // Predicated region
    $region2: #{tpu_custom_call.1} parent=1 // pred_check
      _
    $region3: #{tpu_custom_call.1} parent=1 // pred_check_branch
      %11 = sbr.rel (0) target = $region5
    $region4: #{tpu_custom_call.1} parent=1 // pred_region
      _
    $region5: #{tpu_custom_call.1} parent=1 // pred_fallthru
      _
    // Predicated region
    $region6: #{tpu_custom_call.1} parent=1 // pred_check
      _
    $region7: #{tpu_custom_call.1} parent=1 // pred_check_branch
      %13 = sbr.rel (0) target = $region9
    $region8: #{tpu_custom_call.1} parent=1 // pred_region
      %s15 = ssub.s32 16, 16
      %16 = vsyncadd [#allocation6], %s15
      %s18 = sshll.u32 %s2, 4
      %s19 = int_to_ptr.vmem [resolvable:$true] %s18
      %21 = dma.vmem_to_smem %s19, 16, [#allocation4], [#allocation6]
    $region9: #{tpu_custom_call.1} parent=1 // pred_fallthru
      _
    // Predicated region
    $region10: #{tpu_custom_call.1} parent=1 // pred_check
      _
    $region11: #{tpu_custom_call.1} parent=1 // pred_check_branch
      %23 = sbr.rel (0) target = $region13
    $region12: #{tpu_custom_call.1} parent=1 // pred_region
      %24 = dma.done [#allocation6], 16
    $region13: #{tpu_custom_call.1} parent=1 // pred_fallthru
      _
    %25 = sfence
    %p27 = scmp.eq.s32.totalorder 0, 0
    // Predicated region
    $region14: #{tpu_custom_call.1} parent=1 // pred_check
      %p28 = pneg %p27
    $region15: #{tpu_custom_call.1} parent=1 // pred_check_branch
      %30 = sbr.rel (%p28) target = $region17
    $region16: #{tpu_custom_call.1} parent=1 // pred_region
      // Predicated region
      $region18: #{tpu_custom_call.1} parent=16 // pred_check
        _
      $region19: #{tpu_custom_call.1} parent=16 // pred_check_branch
        %32 = sbr.rel target = $region21
      $region20: #{tpu_custom_call.1} parent=16 // pred_region
        %33 = sst [smem:[#allocation10]] [#allocation9]
        %34 = sst [smem:[#allocation11]] [#allocation8]
      $region21: #{tpu_custom_call.1} parent=16 // pred_fallthru
        _
      %36 = shalt.err (0)
      %s38 = sshll.u32 [#allocation2], 4
      %s39 = int_to_ptr.vmem [resolvable:$true] %s38
      %41 = dma.hbm_to_vmem [thread:$0]  %s1, 1024, %s39, [#allocation3]
      %s42 = smul.u32 4, 16
      %s43 = smul.u32 %s42, 1
      %s44 = sshll.u32 %s43, 4
      %45 = dma.done [#allocation3], %s44
    $region17: #{tpu_custom_call.1} parent=1 // pred_fallthru
      _
    %v46 = vld [vmem:[%s0] sm:$0xff]
    %v47 = vld [vmem:[%s0 + $0x8] sm:$0xff]
    %v48 = vlaneseq
    %v49 = vand.u32 %v48, 127
    %50 = vset.pattern.permute.xlu0 0
    %51 = vperm.xlu0 %50, %v46
    %v52 = vpop.permute.xlu0 %51
    %53 = vset.pattern.permute.xlu0 0
    %54 = vperm.xlu0 %53, %v47
    %v55 = vpop.permute.xlu0 %54
    %vm56 = vcmp.eq.s32.totalorder %v49, %v52
    %vm57 = vcmp.eq.s32.totalorder %v49, %v55
    %v58 = vsel %vm56, 1, 0
    %v59 = vsel %vm57, 1, 0
    %v60 = vcvt.s32.f32 %v58
    %v61 = vcvt.s32.f32 %v59
    %v62 = vpack.c.bf16 %v61, %v60
    %v63 = vld [vmem:[#allocation2] sm:$0xff]
    %v64 = vld [vmem:[#allocation2 + $0x8] sm:$0xff]
    %v65 = vld [vmem:[#allocation2 + $0x10] sm:$0xff]
    %v66 = vld [vmem:[#allocation2 + $0x18] sm:$0xff]
    %v67 = vld [vmem:[#allocation2 + $0x20] sm:$0xff]
    %v68 = vld [vmem:[#allocation2 + $0x28] sm:$0xff]
    %v69 = vld [vmem:[#allocation2 + $0x30] sm:$0xff]
    %v70 = vld [vmem:[#allocation2 + $0x38] sm:$0xff]
    %71 = vmatprep.subr.bf16.mxu0 0
    %72 = vmatpush1.bf16.msra.mxu0 %v63
    %73 = vmatprep.subr.bf16.mxu0 0
    %74 = vmatpush1.bf16.msra.mxu0 %v64
    %75 = vmatprep.subr.bf16.mxu0 0
    %76 = vmatpush1.bf16.msra.mxu0 %v65
    %77 = vmatprep.subr.bf16.mxu0 0
    %78 = vmatpush1.bf16.msra.mxu0 %v66
    %79 = vmatprep.subr.bf16.mxu0 0
    %80 = vmatpush1.bf16.msra.mxu0 %v67
    %81 = vmatprep.subr.bf16.mxu0 0
    %82 = vmatpush1.bf16.msra.mxu0 %v68
    %83 = vmatprep.subr.bf16.mxu0 0
    %84 = vmatpush1.bf16.msra.mxu0 %v69
    %85 = vmatprep.subr.bf16.mxu0 0
    %86 = vmatpush1.bf16.msra.mxu0 %v70
    %87 = vmatprep.subr.bf16.mxu0 0
    %88 = vmatpush1.bf16.msra.mxu0 0
    %89 = vmatprep.subr.bf16.mxu0 0
    %90 = vmatpush1.bf16.msra.mxu0 0
    %91 = vmatprep.subr.bf16.mxu0 0
    %92 = vmatpush1.bf16.msra.mxu0 0
    %93 = vmatprep.subr.bf16.mxu0 0
    %94 = vmatpush1.bf16.msra.mxu0 0
    %95 = vmatprep.subr.bf16.mxu0 0
    %96 = vmatpush1.bf16.msra.mxu0 0
    %97 = vmatprep.subr.bf16.mxu0 0
    %98 = vmatpush1.bf16.msra.mxu0 0
    %99 = vmatprep.subr.bf16.mxu0 0
    %100 = vmatpush1.bf16.msra.mxu0 0
    %101 = vmatprep.subr.bf16.mxu0 0
    %102 = vmatpush1.bf16.msra.mxu0 0
    %103 = vmatprep.mubr.bf16.mxu0 0
    %104 = vmatmul.mubr.bf16.gmra.mrb[0].mxu0 %v62
    %v105 = vpop.f32.mrb[0].mxu0
    %v106 = vadd.f32 0.0, %v105
    %v107 = vpop.f32.mrb[0].mxu0
    %v108 = vpop.f32.mrb[0].mxu0
    %v109 = vadd.f32 0.0, %v108
    %v110 = vpop.f32.mrb[0].mxu0
    %111 = vdwg.mxu0
    %s112 = sld [smem:[#allocation4]]
    %v113 = vstv %s112
    %v114 = vmul.f32 %v106, %v113
    %v115 = vmul.f32 %v109, %v113
    %s116 = sld [smem:[#allocation4 + $0x1]]
    %v117 = vstv %s116
    %v118 = vadd.f32 %v114, %v117
    %v119 = vadd.f32 %v115, %v117
    %120 = vst [vmem:[#allocation7] sm:$0xff] %v118
    %121 = vst [vmem:[#allocation7 + $0x8] sm:$0xff] %v119
    // Predicated region
    $region22: #{tpu_custom_call.1} parent=1 // pred_check
      _
    $region23: #{tpu_custom_call.1} parent=1 // pred_check_branch
      %123 = sbr.rel (0) target = $region25
    $region24: #{tpu_custom_call.1} parent=1 // pred_region
      %s125 = ssub.s32 256, 256
      %126 = vsyncadd [#allocation5], %s125
      %s127 = sshll.u32 [#allocation7], 4
      %s128 = int_to_ptr.vmem [resolvable:$true] %s127
      %133 = dma.vmem_to_hbm [thread:$0]  %s128, 256, %s3, [#allocation5], 128, 128, 8
    $region25: #{tpu_custom_call.1} parent=1 // pred_fallthru
      _
    // Predicated region
    $region26: #{tpu_custom_call.1} parent=1 // pred_check
      _
    $region27: #{tpu_custom_call.1} parent=1 // pred_check_branch
      %135 = sbr.rel (0) target = $region29
    $region28: #{tpu_custom_call.1} parent=1 // pred_region
      %136 = dma.done [#allocation5], 256
    $region29: #{tpu_custom_call.1} parent=1 // pred_fallthru
      _
    %137 = vsyncpa [#allocation5], 1
    %138 = vsyncpa [#allocation6], 1
  %139 = vsyncmov [#allocation3]
  %s140 = vpop.sfrf %139
  %p141 = scmp.eq.s32.totalorder %s140, 0
  %p142 = pneg %p141
  %144 = shalt.err (%p142)

</llo_original>
